<compile_context>
chip_gen: v6e
topology: v6e:2x2x1
jax: 0.10.0
libtpu: 0.0.40
codegen_flags: <defaults>
</compile_context>

<pallas_src>
import jax
import jax.numpy as jnp
from jax.experimental import pallas as pl
from jax.experimental.pallas import tpu as pltpu


def _round_up(a, b):
    return ((a + b - 1) // b) * b


def _mlp_kernel(x_ref, w1x_ref, w1g_ref, b1x_ref, b1g_ref, w2_ref, o_ref):
    """Fused MLP hot path: two gated dots -> silu gate -> down-proj, all in VMEM."""
    x = x_ref[...]                                                 # (TM, H)   compute dtype

    # linear1 (skip_bias_add), split into x-half / gate-half; f32 accumulation on the MXU.
    x_half = jnp.dot(x, w1x_ref[...],
                     preferred_element_type=jnp.float32) + b1x_ref[...]   # (TM, F_in) f32
    gate = jnp.dot(x, w1g_ref[...],
                   preferred_element_type=jnp.float32) + b1g_ref[...]     # (TM, F_in) f32

    # Gated_Activation: silu(gate) * x   (VPU/EUP, f32)
    act = gate * jax.nn.sigmoid(gate) * x_half                     # (TM, F_in) f32

    # linear2 (skip_bias_add): act @ W2, f32 accumulation.
    out = jnp.dot(act.astype(w2_ref.dtype), w2_ref[...],
                  preferred_element_type=jnp.float32)              # (TM, H) f32
    o_ref[...] = out.astype(o_ref.dtype)


def parallel_mlp_forward(hidden_states, w1, b1, w2, b2, *, tm=256, use_bf16=True):
    """hidden_states: [seq, batch, hidden].  Returns (output, output_bias)."""
    seq, batch, hidden = hidden_states.shape
    m = seq * batch
    ffn_dim = w1.shape[1]
    f_in = w2.shape[0]
    assert ffn_dim == 2 * f_in

    # M tile: 128-aligned (MXU row alignment on all generations, bf16 sublane-safe);
    # collapse to a single grid step when M is small.
    tm_eff = min(tm, _round_up(m, 128))
    m_pad = _round_up(m, tm_eff)

    x2d = hidden_states.reshape(m, hidden)
    if m_pad != m:
        x2d = jnp.pad(x2d, ((0, m_pad - m), (0, 0)))

    compute_dtype = jnp.bfloat16 if use_bf16 else hidden_states.dtype
    x2d_c = x2d.astype(compute_dtype)
    w1x = w1[:, :f_in].astype(compute_dtype)
    w1g = w1[:, f_in:].astype(compute_dtype)
    w2_c = w2.astype(compute_dtype)
    b1x = b1[:f_in].reshape(1, f_in).astype(jnp.float32)
    b1g = b1[f_in:].reshape(1, f_in).astype(jnp.float32)

    grid = (m_pad // tm_eff,)
    out2d = pl.pallas_call(
        _mlp_kernel,
        out_shape=jax.ShapeDtypeStruct((m_pad, hidden), hidden_states.dtype),
        grid_spec=pltpu.PrefetchScalarGridSpec(
            num_scalar_prefetch=0,
            grid=grid,
            in_specs=[
                pl.BlockSpec((tm_eff, hidden), lambda i: (i, 0)),   # x tile (streamed)
                pl.BlockSpec((hidden, f_in), lambda i: (0, 0)),     # W1 x-half (resident)
                pl.BlockSpec((hidden, f_in), lambda i: (0, 0)),     # W1 gate-half (resident)
                pl.BlockSpec((1, f_in), lambda i: (0, 0)),          # b1 x-half (resident)
                pl.BlockSpec((1, f_in), lambda i: (0, 0)),          # b1 gate-half (resident)
                pl.BlockSpec((f_in, hidden), lambda i: (0, 0)),     # W2 (resident)
            ],
            out_specs=pl.BlockSpec((tm_eff, hidden), lambda i: (i, 0)),
        ),
        compiler_params=pltpu.CompilerParams(
            dimension_semantics=("parallel",)),
    )(x2d_c, w1x, w1g, b1x, b1g, w2_c)

    if m_pad != m:
        out2d = out2d[:m]
    output = out2d.reshape(seq, batch, hidden)
    # skip_bias_add=True on linear2: bias is returned, not added.
    return output, b2


def _reference(hidden_states, w1, b1, w2, b2, compute_dtype=jnp.float32):
    """Pure-JAX reference, optionally with the same bf16 operand casts as the kernel."""
    f_in = w2.shape[0]
    inter = jnp.einsum("sbh,hf->sbf",
                       hidden_states.astype(compute_dtype), w1.astype(compute_dtype),
                       preferred_element_type=jnp.float32)
    x_half = inter[..., :f_in] + b1[:f_in]
    gate = inter[..., f_in:] + b1[f_in:]
    act = jax.nn.silu(gate) * x_half
    out = jnp.einsum("sbf,fh->sbh",
                     act.astype(compute_dtype), w2.astype(compute_dtype),
                     preferred_element_type=jnp.float32)
    return out.astype(hidden_states.dtype), b2


if __name__ == "__main__":
    seq, batch, hidden = 8, 2, 128
    multiple_of = 256

    # ffn sizing exactly as in ParallelMLP.__init__ (gated branch)
    ffn_dim = 4 * hidden
    ffn_dim_in = ffn_dim
    ffn_dim = int(ffn_dim * 2 / 3)
    ffn_dim_in = ffn_dim // 2
    ffn_dim = int(2 * multiple_of * ((ffn_dim + 2 * multiple_of - 1) // (2 * multiple_of)))
    ffn_dim_in = int(multiple_of * ((ffn_dim_in + multiple_of - 1) // multiple_of))
    assert ffn_dim == 512 and ffn_dim_in == 256

    key = jax.random.PRNGKey(0)
    k_x, k_w1, k_b1, k_w2, k_b2 = jax.random.split(key, 5)

    hidden_states = jax.random.normal(k_x, (seq, batch, hidden), jnp.float32)
    # init_method ~ normal(0, 0.02), like Megatron's init_method_normal
    w1 = 0.02 * jax.random.normal(k_w1, (hidden, ffn_dim), jnp.float32)
    b1 = 0.02 * jax.random.normal(k_b1, (ffn_dim,), jnp.float32)
    w2 = 0.02 * jax.random.normal(k_w2, (ffn_dim_in, hidden), jnp.float32)
    b2 = 0.02 * jax.random.normal(k_b2, (hidden,), jnp.float32)

    out, out_bias = jax.jit(parallel_mlp_forward)(hidden_states, w1, b1, w2, b2)
    jax.block_until_ready(out)
    jax.block_until_ready(out_bias)

    # Matched-precision reference (same bf16 operand casts, f32 accumulation).
    ref_out_bf16, ref_bias = _reference(hidden_states, w1, b1, w2, b2,
                                        compute_dtype=jnp.bfloat16)
    assert jnp.allclose(out, ref_out_bf16, rtol=1e-3, atol=1e-3)

    # Sanity check against the pure f32 reference (loose, bf16 operand rounding).
    ref_out_f32, _ = _reference(hidden_states, w1, b1, w2, b2, compute_dtype=jnp.float32)
    assert jnp.allclose(out, ref_out_f32, rtol=5e-2, atol=5e-3)

    assert jnp.allclose(out_bias, ref_bias)

    print("KERNEL_OK")
</pallas_src>

<mosaic_0001>
module attributes {stable_mosaic.version = 11 : i64} {
  func.func @_mlp_kernel(%arg0: i32, %arg1: memref<128x128xbf16, #tpu.memory_space<vmem>>, %arg2: memref<128x256xbf16, #tpu.memory_space<vmem>>, %arg3: memref<128x256xbf16, #tpu.memory_space<vmem>>, %arg4: memref<1x256xf32, #tpu.memory_space<vmem>>, %arg5: memref<1x256xf32, #tpu.memory_space<vmem>>, %arg6: memref<256x128xbf16, #tpu.memory_space<vmem>>, %arg7: memref<128x128xf32, #tpu.memory_space<vmem>>) attributes {dimension_semantics = [#tpu.dimension_semantics<parallel>], iteration_bounds = array<i64: 1>, scalar_prefetch = 0 : i64, scratch_operands = 0 : i64, tpu.core_type = #tpu.core_type<tc>, window_params = [{transform_indices = @transform_0, window_bounds = array<i64: 128, 128>}, {pipeline_mode = #tpu.pipeline_mode<synchronous>, transform_indices = @transform_1, window_bounds = array<i64: 128, 256>}, {pipeline_mode = #tpu.pipeline_mode<synchronous>, transform_indices = @transform_2, window_bounds = array<i64: 128, 256>}, {pipeline_mode = #tpu.pipeline_mode<synchronous>, transform_indices = @transform_3, window_bounds = array<i64: 1, 256>}, {pipeline_mode = #tpu.pipeline_mode<synchronous>, transform_indices = @transform_4, window_bounds = array<i64: 1, 256>}, {pipeline_mode = #tpu.pipeline_mode<synchronous>, transform_indices = @transform_5, window_bounds = array<i64: 256, 128>}, {transform_indices = @transform_6, window_bounds = array<i64: 128, 128>}]} {
    %c0 = arith.constant 0 : index
    %c0_0 = arith.constant 0 : index
    %0 = vector.load %arg1[%c0, %c0_0] : memref<128x128xbf16, #tpu.memory_space<vmem>>, vector<128x128xbf16>
    %c0_1 = arith.constant 0 : index
    %c0_2 = arith.constant 0 : index
    %1 = vector.load %arg2[%c0_1, %c0_2] : memref<128x256xbf16, #tpu.memory_space<vmem>>, vector<128x256xbf16>
    %cst = arith.constant dense<0.000000e+00> : vector<128x256xf32>
    %2 = tpu.matmul %0, %1, %cst {dimension_numbers = #tpu.dot_dimension_numbers<[1], [0], [0], [1], [0, 0, 1, 1], [], []>} : vector<128x128xbf16>, vector<128x256xbf16>, vector<128x256xf32> -> vector<128x256xf32>
    %c0_3 = arith.constant 0 : index
    %c0_4 = arith.constant 0 : index
    %3 = vector.load %arg4[%c0_3, %c0_4] : memref<1x256xf32, #tpu.memory_space<vmem>>, vector<1x256xf32>
    %4 = vector.broadcast %3 : vector<1x256xf32> to vector<128x256xf32>
    %5 = arith.addf %2, %4 : vector<128x256xf32>
    %c0_5 = arith.constant 0 : index
    %c0_6 = arith.constant 0 : index
    %6 = vector.load %arg3[%c0_5, %c0_6] : memref<128x256xbf16, #tpu.memory_space<vmem>>, vector<128x256xbf16>
    %cst_7 = arith.constant dense<0.000000e+00> : vector<128x256xf32>
    %7 = tpu.matmul %0, %6, %cst_7 {dimension_numbers = #tpu.dot_dimension_numbers<[1], [0], [0], [1], [0, 0, 1, 1], [], []>} : vector<128x128xbf16>, vector<128x256xbf16>, vector<128x256xf32> -> vector<128x256xf32>
    %c0_8 = arith.constant 0 : index
    %c0_9 = arith.constant 0 : index
    %8 = vector.load %arg5[%c0_8, %c0_9] : memref<1x256xf32, #tpu.memory_space<vmem>>, vector<1x256xf32>
    %9 = vector.broadcast %8 : vector<1x256xf32> to vector<128x256xf32>
    %10 = arith.addf %7, %9 : vector<128x256xf32>
    %11 = arith.negf %10 : vector<128x256xf32>
    %12 = math.exp %11 : vector<128x256xf32>
    %cst_10 = arith.constant 1.000000e+00 : f32
    %13 = vector.broadcast %cst_10 : f32 to vector<128x256xf32>
    %14 = arith.addf %13, %12 : vector<128x256xf32>
    %15 = arith.divf %13, %14 : vector<128x256xf32>
    %16 = arith.mulf %10, %15 : vector<128x256xf32>
    %17 = arith.mulf %16, %5 : vector<128x256xf32>
    %18 = arith.truncf %17 : vector<128x256xf32> to vector<128x256xbf16>
    %c0_11 = arith.constant 0 : index
    %c0_12 = arith.constant 0 : index
    %19 = vector.load %arg6[%c0_11, %c0_12] : memref<256x128xbf16, #tpu.memory_space<vmem>>, vector<256x128xbf16>
    %cst_13 = arith.constant dense<0.000000e+00> : vector<128x128xf32>
    %20 = tpu.matmul %18, %19, %cst_13 {dimension_numbers = #tpu.dot_dimension_numbers<[1], [0], [0], [1], [0, 0, 1, 1], [], []>} : vector<128x256xbf16>, vector<256x128xbf16>, vector<128x128xf32> -> vector<128x128xf32>
    %c0_14 = arith.constant 0 : index
    %c0_15 = arith.constant 0 : index
    %21 = vector.load %arg7[%c0_14, %c0_15] : memref<128x128xf32, #tpu.memory_space<vmem>>, vector<128x128xf32>
    tpu.vector_store %arg7[%c0_14, %c0_15], %20 {strides = array<i32>} : memref<128x128xf32, #tpu.memory_space<vmem>>, vector<128x128xf32>,
    return
  }
  func.func @transform_0(%arg0: i32) -> (i32, i32) {
    %c0_i32 = arith.constant 0 : i32
    %c0_i32_0 = arith.constant 0 : i32
    return %arg0, %c0_i32 : i32, i32
  }
  func.func @transform_1(%arg0: i32) -> (i32, i32) {
    %c0_i32 = arith.constant 0 : i32
    %c0_i32_0 = arith.constant 0 : i32
    %c0_i32_1 = arith.constant 0 : i32
    return %c0_i32, %c0_i32_0 : i32, i32
  }
  func.func @transform_2(%arg0: i32) -> (i32, i32) {
    %c0_i32 = arith.constant 0 : i32
    %c0_i32_0 = arith.constant 0 : i32
    %c0_i32_1 = arith.constant 0 : i32
    return %c0_i32, %c0_i32_0 : i32, i32
  }
  func.func @transform_3(%arg0: i32) -> (i32, i32) {
    %c0_i32 = arith.constant 0 : i32
    %c0_i32_0 = arith.constant 0 : i32
    %c0_i32_1 = arith.constant 0 : i32
    return %c0_i32, %c0_i32_0 : i32, i32
  }
  func.func @transform_4(%arg0: i32) -> (i32, i32) {
    %c0_i32 = arith.constant 0 : i32
    %c0_i32_0 = arith.constant 0 : i32
    %c0_i32_1 = arith.constant 0 : i32
    return %c0_i32, %c0_i32_0 : i32, i32
  }
  func.func @transform_5(%arg0: i32) -> (i32, i32) {
    %c0_i32 = arith.constant 0 : i32
    %c0_i32_0 = arith.constant 0 : i32
    %c0_i32_1 = arith.constant 0 : i32
    return %c0_i32, %c0_i32_0 : i32, i32
  }
  func.func @transform_6(%arg0: i32) -> (i32, i32) {
    %c0_i32 = arith.constant 0 : i32
    %c0_i32_0 = arith.constant 0 : i32
    return %arg0, %c0_i32 : i32, i32
  }
}

</mosaic_0001>

<llo_original>
// kernel: parallel_mlp_forward.1
$region0: #{parallel_mlp_forward.1}
  #allocation0 [shape = 'u32[]', space=smem, size = 0x4, offset = 0x4, fixed_abs, tag = 'smem constant byte address 0x4 - core index']
  #allocation1 [shape = 'u32[144,128]{1,0:T(1,128)}', space=vmem, size = 0x12000, scoped, tag = 'internal scratch']
  %s0 = inlined_call_operand.vmem [shape: bf16[128,128], index: 0, kind: input, shape index: {}]
  %s1 = inlined_call_operand.vmem [shape: bf16[128,256], index: 1, kind: input, shape index: {}]
  %s2 = inlined_call_operand.vmem [shape: bf16[128,256], index: 2, kind: input, shape index: {}]
  %s3 = inlined_call_operand.vmem [shape: f32[1,256], index: 3, kind: input, shape index: {}]
  %s4 = inlined_call_operand.vmem [shape: f32[1,256], index: 4, kind: input, shape index: {}]
  %s5 = inlined_call_operand.vmem [shape: bf16[256,128], index: 5, kind: input, shape index: {}]
  %s6 = inlined_call_operand.vmem [shape: f32[128,128], index: 6, kind: output, shape index: {}]
  %s7 = sld [smem:[#allocation0]]
  $region34: #{parallel_mlp_forward.1} parent=0
    _
  %s9 = ssub.s32 1, %s7
  %s10 = scalar_select 0, %s9, %s7
  // Predicated region
  $region2: #{parallel_mlp_forward.1} parent=0 // pred_check
    _
  $region3: #{parallel_mlp_forward.1} parent=0 // pred_check_branch
    %12 = sbr.rel (0) target = $region5
  $region4: #{parallel_mlp_forward.1} parent=0 // pred_region
    _
  $region5: #{parallel_mlp_forward.1} parent=0 // pred_fallthru
    _
  // Predicated region
  $region6: #{parallel_mlp_forward.1} parent=0 // pred_check
    _
  $region7: #{parallel_mlp_forward.1} parent=0 // pred_check_branch
    %14 = sbr.rel (0) target = $region9
  $region8: #{parallel_mlp_forward.1} parent=0 // pred_region
    _
  $region9: #{parallel_mlp_forward.1} parent=0 // pred_fallthru
    _
  // Predicated region
  $region10: #{parallel_mlp_forward.1} parent=0 // pred_check
    _
  $region11: #{parallel_mlp_forward.1} parent=0 // pred_check_branch
    %16 = sbr.rel (0) target = $region13
  $region12: #{parallel_mlp_forward.1} parent=0 // pred_region
    _
  $region13: #{parallel_mlp_forward.1} parent=0 // pred_fallthru
    _
  // Predicated region
  $region14: #{parallel_mlp_forward.1} parent=0 // pred_check
    _
  $region15: #{parallel_mlp_forward.1} parent=0 // pred_check_branch
    %18 = sbr.rel (0) target = $region17
  $region16: #{parallel_mlp_forward.1} parent=0 // pred_region
    _
  $region17: #{parallel_mlp_forward.1} parent=0 // pred_fallthru
    _
  // Predicated region
  $region18: #{parallel_mlp_forward.1} parent=0 // pred_check
    _
  $region19: #{parallel_mlp_forward.1} parent=0 // pred_check_branch
    %20 = sbr.rel (0) target = $region21
  $region20: #{parallel_mlp_forward.1} parent=0 // pred_region
    _
  $region21: #{parallel_mlp_forward.1} parent=0 // pred_fallthru
    _
  // Predicated region
  $region22: #{parallel_mlp_forward.1} parent=0 // pred_check
    _
  $region23: #{parallel_mlp_forward.1} parent=0 // pred_check_branch
    %22 = sbr.rel (0) target = $region25
  $region24: #{parallel_mlp_forward.1} parent=0 // pred_region
    _
  $region25: #{parallel_mlp_forward.1} parent=0 // pred_fallthru
    _
  %v24 = vld [vmem:[%s0] sm:$0xf]
  %v25 = vld [vmem:[%s0 + $0x4] sm:$0xf]
  %v26 = vld [vmem:[%s0 + $0x8] sm:$0xf]
  %v27 = vld [vmem:[%s0 + $0xc] sm:$0xf]
  %v28 = vld [vmem:[%s0 + $0x10] sm:$0xf]
  %v29 = vld [vmem:[%s0 + $0x14] sm:$0xf]
  %v30 = vld [vmem:[%s0 + $0x18] sm:$0xf]
  %v31 = vld [vmem:[%s0 + $0x1c] sm:$0xf]
  %v32 = vld [vmem:[%s0 + $0x20] sm:$0xf]
  %v33 = vld [vmem:[%s0 + $0x24] sm:$0xf]
  %v34 = vld [vmem:[%s0 + $0x28] sm:$0xf]
  %v35 = vld [vmem:[%s0 + $0x2c] sm:$0xf]
  %v36 = vld [vmem:[%s0 + $0x30] sm:$0xf]
  %v37 = vld [vmem:[%s0 + $0x34] sm:$0xf]
  %v38 = vld [vmem:[%s0 + $0x38] sm:$0xf]
  %v39 = vld [vmem:[%s0 + $0x3c] sm:$0xf]
  %v40 = vld [vmem:[%s1] sm:$0xff]
  %v41 = vld [vmem:[%s1 + $0x8] sm:$0xff]
  %v42 = vld [vmem:[%s1 + $0x10] sm:$0xff]
  %v43 = vld [vmem:[%s1 + $0x18] sm:$0xff]
  %v44 = vld [vmem:[%s1 + $0x20] sm:$0xff]
  %v45 = vld [vmem:[%s1 + $0x28] sm:$0xff]
  %v46 = vld [vmem:[%s1 + $0x30] sm:$0xff]
  %v47 = vld [vmem:[%s1 + $0x38] sm:$0xff]
  %v48 = vld [vmem:[%s1 + $0x40] sm:$0xff]
  %v49 = vld [vmem:[%s1 + $0x48] sm:$0xff]
  %v50 = vld [vmem:[%s1 + $0x50] sm:$0xff]
  %v51 = vld [vmem:[%s1 + $0x58] sm:$0xff]
  %v52 = vld [vmem:[%s1 + $0x60] sm:$0xff]
  %v53 = vld [vmem:[%s1 + $0x68] sm:$0xff]
  %v54 = vld [vmem:[%s1 + $0x70] sm:$0xff]
  %v55 = vld [vmem:[%s1 + $0x78] sm:$0xff]
  %v56 = vld [vmem:[%s3] sm:$0x3]
  %v58 = vlaneseq
  %v59 = vshrl.u32 %v58, 7
  %v60 = vsub.s32 0, %v59
  %v61 = vrot.slane %v56, %v60
  %v62 = vlaneseq
  %v63 = vshrl.u32 %v62, 7
  %v64 = vsub.s32 1, %v63
  %v65 = vrot.slane %v56, %v64
  %v84 = vunpack.c.l.b16 %v24
  %v85 = vunpack.c.l.b16 %v25
  %v86 = vunpack.c.l.b16 %v26
  %v87 = vunpack.c.l.b16 %v27
  %v88 = vunpack.c.l.b16 %v28
  %v89 = vunpack.c.l.b16 %v29
  %v90 = vunpack.c.l.b16 %v30
  %v91 = vunpack.c.l.b16 %v31
  %v92 = vunpack.c.l.b16 %v32
  %v93 = vunpack.c.l.b16 %v33
  %v94 = vunpack.c.l.b16 %v34
  %v95 = vunpack.c.l.b16 %v35
  %v96 = vunpack.c.l.b16 %v36
  %v97 = vunpack.c.l.b16 %v37
  %v98 = vunpack.c.l.b16 %v38
  %v99 = vunpack.c.l.b16 %v39
  %v100 = vpack.c.b16 %v85, %v84
  %v101 = vpack.c.b16 %v87, %v86
  %v102 = vpack.c.b16 %v89, %v88
  %v103 = vpack.c.b16 %v91, %v90
  %v104 = vpack.c.b16 %v93, %v92
  %v105 = vpack.c.b16 %v95, %v94
  %v106 = vpack.c.b16 %v97, %v96
  %v107 = vpack.c.b16 %v99, %v98
  %v132 = vunpack.c.l.b16 %v40
  %v133 = vunpack.c.h.b16 %v40
  %v134 = vunpack.c.l.b16 %v41
  %v135 = vunpack.c.h.b16 %v41
  %v136 = vunpack.c.l.b16 %v42
  %v137 = vunpack.c.h.b16 %v42
  %v138 = vunpack.c.l.b16 %v43
  %v139 = vunpack.c.h.b16 %v43
  %v140 = vunpack.c.l.b16 %v44
  %v141 = vunpack.c.h.b16 %v44
  %v142 = vunpack.c.l.b16 %v45
  %v143 = vunpack.c.h.b16 %v45
  %v144 = vunpack.c.l.b16 %v46
  %v145 = vunpack.c.h.b16 %v46
  %v146 = vunpack.c.l.b16 %v47
  %v147 = vunpack.c.h.b16 %v47
  %v148 = vunpack.c.l.b16 %v48
  %v149 = vunpack.c.h.b16 %v48
  %v150 = vunpack.c.l.b16 %v49
  %v151 = vunpack.c.h.b16 %v49
  %v152 = vunpack.c.l.b16 %v50
  %v153 = vunpack.c.h.b16 %v50
  %v154 = vunpack.c.l.b16 %v51
  %v155 = vunpack.c.h.b16 %v51
  %v156 = vunpack.c.l.b16 %v52
  %v157 = vunpack.c.h.b16 %v52
  %v158 = vunpack.c.l.b16 %v53
  %v159 = vunpack.c.h.b16 %v53
  %v160 = vunpack.c.l.b16 %v54
  %v161 = vunpack.c.h.b16 %v54
  %v162 = vunpack.c.l.b16 %v55
  %v163 = vunpack.c.h.b16 %v55
  %v164 = vpack.c.b16 %v134, %v132
  %v165 = vpack.c.b16 %v135, %v133
  %v166 = vpack.c.b16 %v138, %v136
  %v167 = vpack.c.b16 %v139, %v137
  %v168 = vpack.c.b16 %v142, %v140
  %v169 = vpack.c.b16 %v143, %v141
  %v170 = vpack.c.b16 %v146, %v144
  %v171 = vpack.c.b16 %v147, %v145
  %v172 = vpack.c.b16 %v150, %v148
  %v173 = vpack.c.b16 %v151, %v149
  %v174 = vpack.c.b16 %v154, %v152
  %v175 = vpack.c.b16 %v155, %v153
  %v176 = vpack.c.b16 %v158, %v156
  %v177 = vpack.c.b16 %v159, %v157
  %v178 = vpack.c.b16 %v162, %v160
  %v179 = vpack.c.b16 %v163, %v161
  %196 = vmatprep.subr.bf16.mxu0 %v179
  %197 = vmatpush1.bf16.msra.mxu0 %v178
  %198 = vmatprep.subr.bf16.mxu0 %v177
  %199 = vmatpush1.bf16.msra.mxu0 %v176
  %200 = vmatprep.subr.bf16.mxu0 %v175
  %201 = vmatpush1.bf16.msra.mxu0 %v174
  %202 = vmatprep.subr.bf16.mxu0 %v173
  %203 = vmatpush1.bf16.msra.mxu0 %v172
  %204 = vmatprep.subr.bf16.mxu0 %v171
  %205 = vmatpush1.bf16.msra.mxu0 %v170
  %206 = vmatprep.subr.bf16.mxu0 %v169
  %207 = vmatpush1.bf16.msra.mxu0 %v168
  %208 = vmatprep.subr.bf16.mxu0 %v167
  %209 = vmatpush1.bf16.msra.mxu0 %v166
  %210 = vmatprep.subr.bf16.mxu0 %v165
  %211 = vmatpush1.bf16.msra.mxu0 %v164
  %212 = vmatprep.subr.bf16.mxu0 0
  %213 = vmatpush2.bf16.msra.mxu0 0
  %214 = vmatprep.subr.bf16.mxu0 0
  %215 = vmatpush2.bf16.msra.mxu0 0
  %216 = vmatprep.subr.bf16.mxu0 0
  %217 = vmatpush2.bf16.msra.mxu0 0
  %218 = vmatprep.subr.bf16.mxu0 0
  %219 = vmatpush2.bf16.msra.mxu0 0
  %220 = vmatprep.subr.bf16.mxu0 0
  %221 = vmatpush2.bf16.msra.mxu0 0
  %222 = vmatprep.subr.bf16.mxu0 0
  %223 = vmatpush2.bf16.msra.mxu0 0
  %224 = vmatprep.subr.bf16.mxu0 0
  %225 = vmatpush2.bf16.msra.mxu0 0
  %226 = vmatprep.subr.bf16.mxu0 0
  %227 = vmatpush2.bf16.msra.mxu0 0
  %228 = vmatprep.mubr.bf16.mxu0 0
  %229 = vmatmul.mubr.bf16.gmra.mxu0 %v100
  %v230 = vpop.f32.mrf.mxu0
  %v231 = vadd.f32 %v61, %v230
  %v232 = vpop.f32.mrf.mxu0
  %v233 = vadd.f32 %v65, %v232
  %v234 = vpop.f32.mrf.mxu0
  %v235 = vadd.f32 %v61, %v234
  %v236 = vpop.f32.mrf.mxu0
  %v237 = vadd.f32 %v65, %v236
  %238 = vmatprep.mubr.bf16.mxu0 0
  %239 = vmatmul.mubr.bf16.gmra.mxu0 %v101
  %v240 = vpop.f32.mrf.mxu0
  %v241 = vadd.f32 %v61, %v240
  %v242 = vpop.f32.mrf.mxu0
  %v243 = vadd.f32 %v65, %v242
  %v244 = vpop.f32.mrf.mxu0
  %v245 = vadd.f32 %v61, %v244
  %v246 = vpop.f32.mrf.mxu0
  %v247 = vadd.f32 %v65, %v246
  %248 = vmatprep.mubr.bf16.mxu0 0
  %249 = vmatmul.mubr.bf16.gmra.mxu0 %v102
  %v250 = vpop.f32.mrf.mxu0
  %v251 = vadd.f32 %v61, %v250
  %v252 = vpop.f32.mrf.mxu0
  %v253 = vadd.f32 %v65, %v252
  %v254 = vpop.f32.mrf.mxu0
  %v255 = vadd.f32 %v61, %v254
  %v256 = vpop.f32.mrf.mxu0
  %v257 = vadd.f32 %v65, %v256
  %258 = vmatprep.mubr.bf16.mxu0 0
  %259 = vmatmul.mubr.bf16.gmra.mxu0 %v103
  %v260 = vpop.f32.mrf.mxu0
  %v261 = vadd.f32 %v61, %v260
  %v262 = vpop.f32.mrf.mxu0
  %v263 = vadd.f32 %v65, %v262
  %v264 = vpop.f32.mrf.mxu0
  %v265 = vadd.f32 %v61, %v264
  %v266 = vpop.f32.mrf.mxu0
  %v267 = vadd.f32 %v65, %v266
  %268 = vmatprep.mubr.bf16.mxu0 0
  %269 = vmatmul.mubr.bf16.gmra.mxu0 %v104
  %v270 = vpop.f32.mrf.mxu0
  %v271 = vadd.f32 %v61, %v270
  %v272 = vpop.f32.mrf.mxu0
  %v273 = vadd.f32 %v65, %v272
  %v274 = vpop.f32.mrf.mxu0
  %v275 = vadd.f32 %v61, %v274
  %v276 = vpop.f32.mrf.mxu0
  %v277 = vadd.f32 %v65, %v276
  %278 = vmatprep.mubr.bf16.mxu0 0
  %279 = vmatmul.mubr.bf16.gmra.mxu0 %v105
  %v280 = vpop.f32.mrf.mxu0
  %v281 = vadd.f32 %v61, %v280
  %v282 = vpop.f32.mrf.mxu0
  %v283 = vadd.f32 %v65, %v282
  %v284 = vpop.f32.mrf.mxu0
  %v285 = vadd.f32 %v61, %v284
  %v286 = vpop.f32.mrf.mxu0
  %v287 = vadd.f32 %v65, %v286
  %288 = vmatprep.mubr.bf16.mxu0 0
  %289 = vmatmul.mubr.bf16.gmra.mxu0 %v106
  %v290 = vpop.f32.mrf.mxu0
  %v291 = vadd.f32 %v61, %v290
  %v292 = vpop.f32.mrf.mxu0
  %v293 = vadd.f32 %v65, %v292
  %v294 = vpop.f32.mrf.mxu0
  %v295 = vadd.f32 %v61, %v294
  %v296 = vpop.f32.mrf.mxu0
  %v297 = vadd.f32 %v65, %v296
  %298 = vmatprep.mubr.bf16.mxu0 0
  %299 = vmatmul.mubr.bf16.gmra.mxu0 %v107
  %v300 = vpop.f32.mrf.mxu0
  %v301 = vadd.f32 %v61, %v300
  %v302 = vpop.f32.mrf.mxu0
  %v303 = vadd.f32 %v65, %v302
  %v304 = vpop.f32.mrf.mxu0
  %v305 = vadd.f32 %v61, %v304
  %v306 = vpop.f32.mrf.mxu0
  %v307 = vadd.f32 %v65, %v306
  %308 = vdwg.mxu0
  %v309 = vld [vmem:[%s2] sm:$0xff]
  %v310 = vld [vmem:[%s2 + $0x8] sm:$0xff]
  %v311 = vld [vmem:[%s2 + $0x10] sm:$0xff]
  %v312 = vld [vmem:[%s2 + $0x18] sm:$0xff]
  %v313 = vld [vmem:[%s2 + $0x20] sm:$0xff]
  %v314 = vld [vmem:[%s2 + $0x28] sm:$0xff]
  %v315 = vld [vmem:[%s2 + $0x30] sm:$0xff]
  %v316 = vld [vmem:[%s2 + $0x38] sm:$0xff]
  %v317 = vld [vmem:[%s2 + $0x40] sm:$0xff]
  %v318 = vld [vmem:[%s2 + $0x48] sm:$0xff]
  %v319 = vld [vmem:[%s2 + $0x50] sm:$0xff]
  %v320 = vld [vmem:[%s2 + $0x58] sm:$0xff]
  %v321 = vld [vmem:[%s2 + $0x60] sm:$0xff]
  %v322 = vld [vmem:[%s2 + $0x68] sm:$0xff]
  %v323 = vld [vmem:[%s2 + $0x70] sm:$0xff]
  %v324 = vld [vmem:[%s2 + $0x78] sm:$0xff]
  %v325 = vld [vmem:[%s4] sm:$0x3]
  %v327 = vlaneseq
  %v328 = vshrl.u32 %v327, 7
  %v329 = vsub.s32 0, %v328
  %v330 = vrot.slane %v325, %v329
  %v331 = vlaneseq
  %v332 = vshrl.u32 %v331, 7
  %v333 = vsub.s32 1, %v332
  %v334 = vrot.slane %v325, %v333
  %v353 = vunpack.c.l.b16 %v309
  %v354 = vunpack.c.h.b16 %v309
  %v355 = vunpack.c.l.b16 %v310
  %v356 = vunpack.c.h.b16 %v310
  %v357 = vunpack.c.l.b16 %v311
  %v358 = vunpack.c.h.b16 %v311
  %v359 = vunpack.c.l.b16 %v312
  %v360 = vunpack.c.h.b16 %v312
  %v361 = vunpack.c.l.b16 %v313
  %v362 = vunpack.c.h.b16 %v313
  %v363 = vunpack.c.l.b16 %v314
  %v364 = vunpack.c.h.b16 %v314
  %v365 = vunpack.c.l.b16 %v315
  %v366 = vunpack.c.h.b16 %v315
  %v367 = vunpack.c.l.b16 %v316
  %v368 = vunpack.c.h.b16 %v316
  %v369 = vunpack.c.l.b16 %v317
  %v370 = vunpack.c.h.b16 %v317
  %v371 = vunpack.c.l.b16 %v318
  %v372 = vunpack.c.h.b16 %v318
  %v373 = vunpack.c.l.b16 %v319
  %v374 = vunpack.c.h.b16 %v319
  %v375 = vunpack.c.l.b16 %v320
  %v376 = vunpack.c.h.b16 %v320
  %v377 = vunpack.c.l.b16 %v321
  %v378 = vunpack.c.h.b16 %v321
  %v379 = vunpack.c.l.b16 %v322
  %v380 = vunpack.c.h.b16 %v322
  %v381 = vunpack.c.l.b16 %v323
  %v382 = vunpack.c.h.b16 %v323
  %v383 = vunpack.c.l.b16 %v324
  %v384 = vunpack.c.h.b16 %v324
  %v385 = vpack.c.b16 %v355, %v353
  %v386 = vpack.c.b16 %v356, %v354
  %v387 = vpack.c.b16 %v359, %v357
  %v388 = vpack.c.b16 %v360, %v358
  %v389 = vpack.c.b16 %v363, %v361
  %v390 = vpack.c.b16 %v364, %v362
  %v391 = vpack.c.b16 %v367, %v365
  %v392 = vpack.c.b16 %v368, %v366
  %v393 = vpack.c.b16 %v371, %v369
  %v394 = vpack.c.b16 %v372, %v370
  %v395 = vpack.c.b16 %v375, %v373
  %v396 = vpack.c.b16 %v376, %v374
  %v397 = vpack.c.b16 %v379, %v377
  %v398 = vpack.c.b16 %v380, %v378
  %v399 = vpack.c.b16 %v383, %v381
  %v400 = vpack.c.b16 %v384, %v382
  %417 = vmatprep.subr.bf16.mxu0 %v400
  %418 = vmatpush1.bf16.msra.mxu0 %v399
  %419 = vmatprep.subr.bf16.mxu0 %v398
  %420 = vmatpush1.bf16.msra.mxu0 %v397
  %421 = vmatprep.subr.bf16.mxu0 %v396
  %422 = vmatpush1.bf16.msra.mxu0 %v395
  %423 = vmatprep.subr.bf16.mxu0 %v394
  %424 = vmatpush1.bf16.msra.mxu0 %v393
  %425 = vmatprep.subr.bf16.mxu0 %v392
  %426 = vmatpush1.bf16.msra.mxu0 %v391
  %427 = vmatprep.subr.bf16.mxu0 %v390
  %428 = vmatpush1.bf16.msra.mxu0 %v389
  %429 = vmatprep.subr.bf16.mxu0 %v388
  %430 = vmatpush1.bf16.msra.mxu0 %v387
  %431 = vmatprep.subr.bf16.mxu0 %v386
  %432 = vmatpush1.bf16.msra.mxu0 %v385
  %433 = vmatprep.subr.bf16.mxu0 0
  %434 = vmatpush2.bf16.msra.mxu0 0
  %435 = vmatprep.subr.bf16.mxu0 0
  %436 = vmatpush2.bf16.msra.mxu0 0
  %437 = vmatprep.subr.bf16.mxu0 0
  %438 = vmatpush2.bf16.msra.mxu0 0
  %439 = vmatprep.subr.bf16.mxu0 0
  %440 = vmatpush2.bf16.msra.mxu0 0
  %441 = vmatprep.subr.bf16.mxu0 0
  %442 = vmatpush2.bf16.msra.mxu0 0
  %443 = vmatprep.subr.bf16.mxu0 0
  %444 = vmatpush2.bf16.msra.mxu0 0
  %445 = vmatprep.subr.bf16.mxu0 0
  %446 = vmatpush2.bf16.msra.mxu0 0
  %447 = vmatprep.subr.bf16.mxu0 0
  %448 = vmatpush2.bf16.msra.mxu0 0
  %449 = vmatprep.mubr.bf16.mxu0 0
  %450 = vmatmul.mubr.bf16.gmra.mxu0 %v100
  %v451 = vpop.f32.mrf.mxu0
  %v452 = vadd.f32 %v330, %v451
  %v453 = vpop.f32.mrf.mxu0
  %v454 = vadd.f32 %v334, %v453
  %v455 = vpop.f32.mrf.mxu0
  %v456 = vadd.f32 %v330, %v455
  %v457 = vpop.f32.mrf.mxu0
  %v458 = vadd.f32 %v334, %v457
  %459 = vmatprep.mubr.bf16.mxu0 0
  %460 = vmatmul.mubr.bf16.gmra.mxu0 %v101
  %v461 = vpop.f32.mrf.mxu0
  %v462 = vadd.f32 %v330, %v461
  %v463 = vpop.f32.mrf.mxu0
  %v464 = vadd.f32 %v334, %v463
  %v465 = vpop.f32.mrf.mxu0
  %v466 = vadd.f32 %v330, %v465
  %v467 = vpop.f32.mrf.mxu0
  %v468 = vadd.f32 %v334, %v467
  %469 = vmatprep.mubr.bf16.mxu0 0
  %470 = vmatmul.mubr.bf16.gmra.mxu0 %v102
  %v471 = vpop.f32.mrf.mxu0
  %v472 = vadd.f32 %v330, %v471
  %v473 = vpop.f32.mrf.mxu0
  %v474 = vadd.f32 %v334, %v473
  %v475 = vpop.f32.mrf.mxu0
  %v476 = vadd.f32 %v330, %v475
  %v477 = vpop.f32.mrf.mxu0
  %v478 = vadd.f32 %v334, %v477
  %479 = vmatprep.mubr.bf16.mxu0 0
  %480 = vmatmul.mubr.bf16.gmra.mxu0 %v103
  %v481 = vpop.f32.mrf.mxu0
  %v482 = vadd.f32 %v330, %v481
  %v483 = vpop.f32.mrf.mxu0
  %v484 = vadd.f32 %v334, %v483
  %v485 = vpop.f32.mrf.mxu0
  %v486 = vadd.f32 %v330, %v485
  %v487 = vpop.f32.mrf.mxu0
  %v488 = vadd.f32 %v334, %v487
  %489 = vmatprep.mubr.bf16.mxu0 0
  %490 = vmatmul.mubr.bf16.gmra.mxu0 %v104
  %v491 = vpop.f32.mrf.mxu0
  %v492 = vadd.f32 %v330, %v491
  %v493 = vpop.f32.mrf.mxu0
  %v494 = vadd.f32 %v334, %v493
  %v495 = vpop.f32.mrf.mxu0
  %v496 = vadd.f32 %v330, %v495
  %v497 = vpop.f32.mrf.mxu0
  %v498 = vadd.f32 %v334, %v497
  %499 = vmatprep.mubr.bf16.mxu0 0
  %500 = vmatmul.mubr.bf16.gmra.mxu0 %v105
  %v501 = vpop.f32.mrf.mxu0
  %v502 = vadd.f32 %v330, %v501
  %v503 = vpop.f32.mrf.mxu0
  %v504 = vadd.f32 %v334, %v503
  %v505 = vpop.f32.mrf.mxu0
  %v506 = vadd.f32 %v330, %v505
  %v507 = vpop.f32.mrf.mxu0
  %v508 = vadd.f32 %v334, %v507
  %509 = vmatprep.mubr.bf16.mxu0 0
  %510 = vmatmul.mubr.bf16.gmra.mxu0 %v106
  %v511 = vpop.f32.mrf.mxu0
  %v512 = vadd.f32 %v330, %v511
  %v513 = vpop.f32.mrf.mxu0
  %v514 = vadd.f32 %v334, %v513
  %v515 = vpop.f32.mrf.mxu0
  %v516 = vadd.f32 %v330, %v515
  %v517 = vpop.f32.mrf.mxu0
  %v518 = vadd.f32 %v334, %v517
  %519 = vmatprep.mubr.bf16.mxu0 0
  %520 = vmatmul.mubr.bf16.gmra.mxu0 %v107
  %v521 = vpop.f32.mrf.mxu0
  %v522 = vadd.f32 %v330, %v521
  %v523 = vpop.f32.mrf.mxu0
  %v524 = vadd.f32 %v334, %v523
  %v525 = vpop.f32.mrf.mxu0
  %v526 = vadd.f32 %v330, %v525
  %v527 = vpop.f32.mrf.mxu0
  %v528 = vadd.f32 %v334, %v527
  %529 = vdwg.mxu0
  %v530 = vxor.u32 %v452, 2147483648
  %v531 = vxor.u32 %v454, 2147483648
  %v532 = vxor.u32 %v456, 2147483648
  %v533 = vxor.u32 %v458, 2147483648
  %v534 = vxor.u32 %v462, 2147483648
  %v535 = vxor.u32 %v464, 2147483648
  %v536 = vxor.u32 %v466, 2147483648
  %v537 = vxor.u32 %v468, 2147483648
  %v538 = vxor.u32 %v472, 2147483648
  %v539 = vxor.u32 %v474, 2147483648
  %v540 = vxor.u32 %v476, 2147483648
  %v541 = vxor.u32 %v478, 2147483648
  %v542 = vxor.u32 %v482, 2147483648
  %v543 = vxor.u32 %v484, 2147483648
  %v544 = vxor.u32 %v486, 2147483648
  %v545 = vxor.u32 %v488, 2147483648
  %v546 = vxor.u32 %v492, 2147483648
  %v547 = vxor.u32 %v494, 2147483648
  %v548 = vxor.u32 %v496, 2147483648
  %v549 = vxor.u32 %v498, 2147483648
  %v550 = vxor.u32 %v502, 2147483648
  %v551 = vxor.u32 %v504, 2147483648
  %v552 = vxor.u32 %v506, 2147483648
  %v553 = vxor.u32 %v508, 2147483648
  %v554 = vxor.u32 %v512, 2147483648
  %v555 = vxor.u32 %v514, 2147483648
  %v556 = vxor.u32 %v516, 2147483648
  %v557 = vxor.u32 %v518, 2147483648
  %v558 = vxor.u32 %v522, 2147483648
  %v559 = vxor.u32 %v524, 2147483648
  %v560 = vxor.u32 %v526, 2147483648
  %v561 = vxor.u32 %v528, 2147483648
  %v562 = vmul.f32 %v530, 1.442695
  %v563 = vpow.pop %v562
  %v564 = vmul.f32 %v531, 1.442695
  %v565 = vpow.pop %v564
  %v566 = vmul.f32 %v532, 1.442695
  %v567 = vpow.pop %v566
  %v568 = vmul.f32 %v533, 1.442695
  %v569 = vpow.pop %v568
  %v570 = vmul.f32 %v534, 1.442695
  %v571 = vpow.pop %v570
  %v572 = vmul.f32 %v535, 1.442695
  %v573 = vpow.pop %v572
  %v574 = vmul.f32 %v536, 1.442695
  %v575 = vpow.pop %v574
  %v576 = vmul.f32 %v537, 1.442695
  %v577 = vpow.pop %v576
  %v578 = vmul.f32 %v538, 1.442695
  %v579 = vpow.pop %v578
  %v580 = vmul.f32 %v539, 1.442695
  %v581 = vpow.pop %v580
  %v582 = vmul.f32 %v540, 1.442695
  %v583 = vpow.pop %v582
  %v584 = vmul.f32 %v541, 1.442695
  %v585 = vpow.pop %v584
  %v586 = vmul.f32 %v542, 1.442695
  %v587 = vpow.pop %v586
  %v588 = vmul.f32 %v543, 1.442695
  %v589 = vpow.pop %v588
  %v590 = vmul.f32 %v544, 1.442695
  %v591 = vpow.pop %v590
  %v592 = vmul.f32 %v545, 1.442695
  %v593 = vpow.pop %v592
  %v594 = vmul.f32 %v546, 1.442695
  %v595 = vpow.pop %v594
  %v596 = vmul.f32 %v547, 1.442695
  %v597 = vpow.pop %v596
  %v598 = vmul.f32 %v548, 1.442695
  %v599 = vpow.pop %v598
  %v600 = vmul.f32 %v549, 1.442695
  %v601 = vpow.pop %v600
  %v602 = vmul.f32 %v550, 1.442695
  %v603 = vpow.pop %v602
  %v604 = vmul.f32 %v551, 1.442695
  %v605 = vpow.pop %v604
  %v606 = vmul.f32 %v552, 1.442695
  %v607 = vpow.pop %v606
  %v608 = vmul.f32 %v553, 1.442695
  %v609 = vpow.pop %v608
  %v610 = vmul.f32 %v554, 1.442695
  %v611 = vpow.pop %v610
  %v612 = vmul.f32 %v555, 1.442695
  %v613 = vpow.pop %v612
  %v614 = vmul.f32 %v556, 1.442695
  %v615 = vpow.pop %v614
  %v616 = vmul.f32 %v557, 1.442695
  %v617 = vpow.pop %v616
  %v618 = vmul.f32 %v558, 1.442695
  %v619 = vpow.pop %v618
  %v620 = vmul.f32 %v559, 1.442695
  %v621 = vpow.pop %v620
  %v622 = vmul.f32 %v560, 1.442695
  %v623 = vpow.pop %v622
  %v624 = vmul.f32 %v561, 1.442695
  %v625 = vpow.pop %v624
  %v626 = vadd.f32 %v563, 1.0
  %v627 = vadd.f32 %v565, 1.0
  %v628 = vadd.f32 %v567, 1.0
  %v629 = vadd.f32 %v569, 1.0
  %v630 = vadd.f32 %v571, 1.0
  %v631 = vadd.f32 %v573, 1.0
  %v632 = vadd.f32 %v575, 1.0
  %v633 = vadd.f32 %v577, 1.0
  %v634 = vadd.f32 %v579, 1.0
  %v635 = vadd.f32 %v581, 1.0
  %v636 = vadd.f32 %v583, 1.0
  %v637 = vadd.f32 %v585, 1.0
  %v638 = vadd.f32 %v587, 1.0
  %v639 = vadd.f32 %v589, 1.0
  %v640 = vadd.f32 %v591, 1.0
  %v641 = vadd.f32 %v593, 1.0
  %v642 = vadd.f32 %v595, 1.0
  %v643 = vadd.f32 %v597, 1.0
  %v644 = vadd.f32 %v599, 1.0
  %v645 = vadd.f32 %v601, 1.0
  %v646 = vadd.f32 %v603, 1.0
  %v647 = vadd.f32 %v605, 1.0
  %v648 = vadd.f32 %v607, 1.0
  %v649 = vadd.f32 %v609, 1.0
  %v650 = vadd.f32 %v611, 1.0
  %v651 = vadd.f32 %v613, 1.0
  %v652 = vadd.f32 %v615, 1.0
  %v653 = vadd.f32 %v617, 1.0
  %v654 = vadd.f32 %v619, 1.0
  %v655 = vadd.f32 %v621, 1.0
  %v656 = vadd.f32 %v623, 1.0
  %v657 = vadd.f32 %v625, 1.0
  %v658 = vrcp.pop %v626
  %v659 = vmul.f32 1.0, %v658
  %v660 = vrcp.pop %v627
  %v661 = vmul.f32 1.0, %v660
  %v662 = vrcp.pop %v628
  %v663 = vmul.f32 1.0, %v662
  %v664 = vrcp.pop %v629
  %v665 = vmul.f32 1.0, %v664
  %v666 = vrcp.pop %v630
  %v667 = vmul.f32 1.0, %v666
  %v668 = vrcp.pop %v631
  %v669 = vmul.f32 1.0, %v668
  %v670 = vrcp.pop %v632
  %v671 = vmul.f32 1.0, %v670
  %v672 = vrcp.pop %v633
  %v673 = vmul.f32 1.0, %v672
  %v674 = vrcp.pop %v634
  %v675 = vmul.f32 1.0, %v674
  %v676 = vrcp.pop %v635
  %v677 = vmul.f32 1.0, %v676
  %v678 = vrcp.pop %v636
  %v679 = vmul.f32 1.0, %v678
  %v680 = vrcp.pop %v637
  %v681 = vmul.f32 1.0, %v680
  %v682 = vrcp.pop %v638
  %v683 = vmul.f32 1.0, %v682
  %v684 = vrcp.pop %v639
  %v685 = vmul.f32 1.0, %v684
  %v686 = vrcp.pop %v640
  %v687 = vmul.f32 1.0, %v686
  %v688 = vrcp.pop %v641
  %v689 = vmul.f32 1.0, %v688
  %v690 = vrcp.pop %v642
  %v691 = vmul.f32 1.0, %v690
  %v692 = vrcp.pop %v643
  %v693 = vmul.f32 1.0, %v692
  %v694 = vrcp.pop %v644
  %v695 = vmul.f32 1.0, %v694
  %v696 = vrcp.pop %v645
  %v697 = vmul.f32 1.0, %v696
  %v698 = vrcp.pop %v646
  %v699 = vmul.f32 1.0, %v698
  %v700 = vrcp.pop %v647
  %v701 = vmul.f32 1.0, %v700
  %v702 = vrcp.pop %v648
  %v703 = vmul.f32 1.0, %v702
  %v704 = vrcp.pop %v649
  %v705 = vmul.f32 1.0, %v704
  %v706 = vrcp.pop %v650
  %v707 = vmul.f32 1.0, %v706
  %v708 = vrcp.pop %v651
  %v709 = vmul.f32 1.0, %v708
  %v710 = vrcp.pop %v652
  %v711 = vmul.f32 1.0, %v710
  %v712 = vrcp.pop %v653
  %v713 = vmul.f32 1.0, %v712
  %v714 = vrcp.pop %v654
  %v715 = vmul.f32 1.0, %v714
  %v716 = vrcp.pop %v655
  %v717 = vmul.f32 1.0, %v716
  %v718 = vrcp.pop %v656
  %v719 = vmul.f32 1.0, %v718
  %v720 = vrcp.pop %v657
  %v721 = vmul.f32 1.0, %v720
  %v722 = vmul.f32 %v452, %v659
  %v723 = vmul.f32 %v454, %v661
  %v724 = vmul.f32 %v456, %v663
  %v725 = vmul.f32 %v458, %v665
  %v726 = vmul.f32 %v462, %v667
  %v727 = vmul.f32 %v464, %v669
  %v728 = vmul.f32 %v466, %v671
  %v729 = vmul.f32 %v468, %v673
  %v730 = vmul.f32 %v472, %v675
  %v731 = vmul.f32 %v474, %v677
  %v732 = vmul.f32 %v476, %v679
  %v733 = vmul.f32 %v478, %v681
  %v734 = vmul.f32 %v482, %v683
  %v735 = vmul.f32 %v484, %v685
  %v736 = vmul.f32 %v486, %v687
  %v737 = vmul.f32 %v488, %v689
  %v738 = vmul.f32 %v492, %v691
  %v739 = vmul.f32 %v494, %v693
  %v740 = vmul.f32 %v496, %v695
  %v741 = vmul.f32 %v498, %v697
  %v742 = vmul.f32 %v502, %v699
  %v743 = vmul.f32 %v504, %v701
  %v744 = vmul.f32 %v506, %v703
  %v745 = vmul.f32 %v508, %v705
  %v746 = vmul.f32 %v512, %v707
  %v747 = vmul.f32 %v514, %v709
  %v748 = vmul.f32 %v516, %v711
  %v749 = vmul.f32 %v518, %v713
  %v750 = vmul.f32 %v522, %v715
  %v751 = vmul.f32 %v524, %v717
  %v752 = vmul.f32 %v526, %v719
  %v753 = vmul.f32 %v528, %v721
  %v754 = vmul.f32 %v722, %v231
  %v755 = vmul.f32 %v723, %v233
  %v756 = vmul.f32 %v724, %v235
  %v757 = vmul.f32 %v725, %v237
  %v758 = vmul.f32 %v726, %v241
  %v759 = vmul.f32 %v727, %v243
  %v760 = vmul.f32 %v728, %v245
  %v761 = vmul.f32 %v729, %v247
  %v762 = vmul.f32 %v730, %v251
  %v763 = vmul.f32 %v731, %v253
  %v764 = vmul.f32 %v732, %v255
  %v765 = vmul.f32 %v733, %v257
  %v766 = vmul.f32 %v734, %v261
  %v767 = vmul.f32 %v735, %v263
  %v768 = vmul.f32 %v736, %v265
  %v769 = vmul.f32 %v737, %v267
  %v770 = vmul.f32 %v738, %v271
  %v771 = vmul.f32 %v739, %v273
  %v772 = vmul.f32 %v740, %v275
  %v773 = vmul.f32 %v741, %v277
  %v774 = vmul.f32 %v742, %v281
  %v775 = vmul.f32 %v743, %v283
  %v776 = vmul.f32 %v744, %v285
  %v777 = vmul.f32 %v745, %v287
  %v778 = vmul.f32 %v746, %v291
  %v779 = vmul.f32 %v747, %v293
  %v780 = vmul.f32 %v748, %v295
  %v781 = vmul.f32 %v749, %v297
  %v782 = vmul.f32 %v750, %v301
  %v783 = vmul.f32 %v751, %v303
  %v784 = vmul.f32 %v752, %v305
  %v785 = vmul.f32 %v753, %v307
  %v786 = vpack.c.bf16 %v756, %v754
  %v787 = vpack.c.bf16 %v757, %v755
  %v788 = vpack.c.bf16 %v760, %v758
  %v789 = vpack.c.bf16 %v761, %v759
  %v790 = vpack.c.bf16 %v764, %v762
  %v791 = vpack.c.bf16 %v765, %v763
  %v792 = vpack.c.bf16 %v768, %v766
  %v793 = vpack.c.bf16 %v769, %v767
  %v794 = vpack.c.bf16 %v772, %v770
  %v795 = vpack.c.bf16 %v773, %v771
  %v796 = vpack.c.bf16 %v776, %v774
  %v797 = vpack.c.bf16 %v777, %v775
  %v798 = vpack.c.bf16 %v780, %v778
  %v799 = vpack.c.bf16 %v781, %v779
  %v800 = vpack.c.bf16 %v784, %v782
  %v801 = vpack.c.bf16 %v785, %v783
  %v802 = vld [vmem:[%s5] sm:$0xf]
  %v803 = vld [vmem:[%s5 + $0x4] sm:$0xf]
  %v804 = vld [vmem:[%s5 + $0x8] sm:$0xf]
  %v805 = vld [vmem:[%s5 + $0xc] sm:$0xf]
  %v806 = vld [vmem:[%s5 + $0x10] sm:$0xf]
  %v807 = vld [vmem:[%s5 + $0x14] sm:$0xf]
  %v808 = vld [vmem:[%s5 + $0x18] sm:$0xf]
  %v809 = vld [vmem:[%s5 + $0x1c] sm:$0xf]
  %v810 = vld [vmem:[%s5 + $0x20] sm:$0xf]
  %v811 = vld [vmem:[%s5 + $0x24] sm:$0xf]
  %v812 = vld [vmem:[%s5 + $0x28] sm:$0xf]
  %v813 = vld [vmem:[%s5 + $0x2c] sm:$0xf]
  %v814 = vld [vmem:[%s5 + $0x30] sm:$0xf]
  %v815 = vld [vmem:[%s5 + $0x34] sm:$0xf]
  %v816 = vld [vmem:[%s5 + $0x38] sm:$0xf]
  %v817 = vld [vmem:[%s5 + $0x3c] sm:$0xf]
  %v818 = vld [vmem:[%s5 + $0x40] sm:$0xf]
  %v819 = vld [vmem:[%s5 + $0x44] sm:$0xf]
  %v820 = vld [vmem:[%s5 + $0x48] sm:$0xf]
  %v821 = vld [vmem:[%s5 + $0x4c] sm:$0xf]
  %v822 = vld [vmem:[%s5 + $0x50] sm:$0xf]
  %v823 = vld [vmem:[%s5 + $0x54] sm:$0xf]
  %v824 = vld [vmem:[%s5 + $0x58] sm:$0xf]
  %v825 = vld [vmem:[%s5 + $0x5c] sm:$0xf]
  %v826 = vld [vmem:[%s5 + $0x60] sm:$0xf]
  %v827 = vld [vmem:[%s5 + $0x64] sm:$0xf]
  %v828 = vld [vmem:[%s5 + $0x68] sm:$0xf]
  %v829 = vld [vmem:[%s5 + $0x6c] sm:$0xf]
  %v830 = vld [vmem:[%s5 + $0x70] sm:$0xf]
  %v831 = vld [vmem:[%s5 + $0x74] sm:$0xf]
  %v832 = vld [vmem:[%s5 + $0x78] sm:$0xf]
  %v833 = vld [vmem:[%s5 + $0x7c] sm:$0xf]
  %v866 = vunpack.c.l.b16 %v802
  %v867 = vunpack.c.l.b16 %v803
  %v868 = vunpack.c.l.b16 %v804
  %v869 = vunpack.c.l.b16 %v805
  %v870 = vunpack.c.l.b16 %v806
  %v871 = vunpack.c.l.b16 %v807
  %v872 = vunpack.c.l.b16 %v808
  %v873 = vunpack.c.l.b16 %v809
  %v874 = vunpack.c.l.b16 %v810
  %v875 = vunpack.c.l.b16 %v811
  %v876 = vunpack.c.l.b16 %v812
  %v877 = vunpack.c.l.b16 %v813
  %v878 = vunpack.c.l.b16 %v814
  %v879 = vunpack.c.l.b16 %v815
  %v880 = vunpack.c.l.b16 %v816
  %v881 = vunpack.c.l.b16 %v817
  %v882 = vunpack.c.l.b16 %v818
  %v883 = vunpack.c.l.b16 %v819
  %v884 = vunpack.c.l.b16 %v820
  %v885 = vunpack.c.l.b16 %v821
  %v886 = vunpack.c.l.b16 %v822
  %v887 = vunpack.c.l.b16 %v823
  %v888 = vunpack.c.l.b16 %v824
  %v889 = vunpack.c.l.b16 %v825
  %v890 = vunpack.c.l.b16 %v826
  %v891 = vunpack.c.l.b16 %v827
  %v892 = vunpack.c.l.b16 %v828
  %v893 = vunpack.c.l.b16 %v829
  %v894 = vunpack.c.l.b16 %v830
  %v895 = vunpack.c.l.b16 %v831
  %v896 = vunpack.c.l.b16 %v832
  %v897 = vunpack.c.l.b16 %v833
  %v898 = vpack.c.b16 %v867, %v866
  %v899 = vpack.c.b16 %v869, %v868
  %v900 = vpack.c.b16 %v871, %v870
  %v901 = vpack.c.b16 %v873, %v872
  %v902 = vpack.c.b16 %v875, %v874
  %v903 = vpack.c.b16 %v877, %v876
  %v904 = vpack.c.b16 %v879, %v878
  %v905 = vpack.c.b16 %v881, %v880
  %v906 = vpack.c.b16 %v883, %v882
  %v907 = vpack.c.b16 %v885, %v884
  %v908 = vpack.c.b16 %v887, %v886
  %v909 = vpack.c.b16 %v889, %v888
  %v910 = vpack.c.b16 %v891, %v890
  %v911 = vpack.c.b16 %v893, %v892
  %v912 = vpack.c.b16 %v895, %v894
  %v913 = vpack.c.b16 %v897, %v896
  %930 = vmatprep.subr.bf16.mxu0 0
  %931 = vmatpush1.bf16.msra.mxu0 %v905
  %932 = vmatprep.subr.bf16.mxu0 0
  %933 = vmatpush1.bf16.msra.mxu0 %v904
  %934 = vmatprep.subr.bf16.mxu0 0
  %935 = vmatpush1.bf16.msra.mxu0 %v903
  %936 = vmatprep.subr.bf16.mxu0 0
  %937 = vmatpush1.bf16.msra.mxu0 %v902
  %938 = vmatprep.subr.bf16.mxu0 0
  %939 = vmatpush1.bf16.msra.mxu0 %v901
  %940 = vmatprep.subr.bf16.mxu0 0
  %941 = vmatpush1.bf16.msra.mxu0 %v900
  %942 = vmatprep.subr.bf16.mxu0 0
  %943 = vmatpush1.bf16.msra.mxu0 %v899
  %944 = vmatprep.subr.bf16.mxu0 0
  %945 = vmatpush1.bf16.msra.mxu0 %v898
  %946 = vmatprep.subr.bf16.mxu0 0
  %947 = vmatpush2.bf16.msra.mxu0 %v913
  %948 = vmatprep.subr.bf16.mxu0 0
  %949 = vmatpush2.bf16.msra.mxu0 %v912
  %950 = vmatprep.subr.bf16.mxu0 0
  %951 = vmatpush2.bf16.msra.mxu0 %v911
  %952 = vmatprep.subr.bf16.mxu0 0
  %953 = vmatpush2.bf16.msra.mxu0 %v910
  %954 = vmatprep.subr.bf16.mxu0 0
  %955 = vmatpush2.bf16.msra.mxu0 %v909
  %956 = vmatprep.subr.bf16.mxu0 0
  %957 = vmatpush2.bf16.msra.mxu0 %v908
  %958 = vmatprep.subr.bf16.mxu0 0
  %959 = vmatpush2.bf16.msra.mxu0 %v907
  %960 = vmatprep.subr.bf16.mxu0 0
  %961 = vmatpush2.bf16.msra.mxu0 %v906
  %962 = vmatprep.mubr.bf16.mxu0 %v787
  %963 = vmatmul.mubr.bf16.gmra.mxu0 %v786
  %v964 = vpop.f32.mrf.mxu0
  %v965 = vadd.f32 0.0, %v964
  %v966 = vpop.f32.mrf.mxu0
  %v967 = vpop.f32.mrf.mxu0
  %v968 = vadd.f32 0.0, %v967
  %v969 = vpop.f32.mrf.mxu0
  %970 = vmatprep.mubr.bf16.mxu0 %v789
  %971 = vmatmul.mubr.bf16.gmra.mxu0 %v788
  %v972 = vpop.f32.mrf.mxu0
  %v973 = vadd.f32 0.0, %v972
  %v974 = vpop.f32.mrf.mxu0
  %v975 = vpop.f32.mrf.mxu0
  %v976 = vadd.f32 0.0, %v975
  %v977 = vpop.f32.mrf.mxu0
  %978 = vmatprep.mubr.bf16.mxu0 %v791
  %979 = vmatmul.mubr.bf16.gmra.mxu0 %v790
  %v980 = vpop.f32.mrf.mxu0
  %v981 = vadd.f32 0.0, %v980
  %v982 = vpop.f32.mrf.mxu0
  %v983 = vpop.f32.mrf.mxu0
  %v984 = vadd.f32 0.0, %v983
  %v985 = vpop.f32.mrf.mxu0
  %986 = vmatprep.mubr.bf16.mxu0 %v793
  %987 = vmatmul.mubr.bf16.gmra.mxu0 %v792
  %v988 = vpop.f32.mrf.mxu0
  %v989 = vadd.f32 0.0, %v988
  %v990 = vpop.f32.mrf.mxu0
  %v991 = vpop.f32.mrf.mxu0
  %v992 = vadd.f32 0.0, %v991
  %v993 = vpop.f32.mrf.mxu0
  %994 = vmatprep.mubr.bf16.mxu0 %v795
  %995 = vmatmul.mubr.bf16.gmra.mxu0 %v794
  %v996 = vpop.f32.mrf.mxu0
  %v997 = vadd.f32 0.0, %v996
  %v998 = vpop.f32.mrf.mxu0
  %v999 = vpop.f32.mrf.mxu0
  %v1000 = vadd.f32 0.0, %v999
  %v1001 = vpop.f32.mrf.mxu0
  %1002 = vmatprep.mubr.bf16.mxu0 %v797
  %1003 = vmatmul.mubr.bf16.gmra.mxu0 %v796
  %v1004 = vpop.f32.mrf.mxu0
  %v1005 = vadd.f32 0.0, %v1004
  %v1006 = vpop.f32.mrf.mxu0
  %v1007 = vpop.f32.mrf.mxu0
  %v1008 = vadd.f32 0.0, %v1007
  %v1009 = vpop.f32.mrf.mxu0
  %1010 = vmatprep.mubr.bf16.mxu0 %v799
  %1011 = vmatmul.mubr.bf16.gmra.mxu0 %v798
  %v1012 = vpop.f32.mrf.mxu0
  %v1013 = vadd.f32 0.0, %v1012
  %v1014 = vpop.f32.mrf.mxu0
  %v1015 = vpop.f32.mrf.mxu0
  %v1016 = vadd.f32 0.0, %v1015
  %v1017 = vpop.f32.mrf.mxu0
  %1018 = vmatprep.mubr.bf16.mxu0 %v801
  %1019 = vmatmul.mubr.bf16.gmra.mxu0 %v800
  %v1020 = vpop.f32.mrf.mxu0
  %v1021 = vadd.f32 0.0, %v1020
  %v1022 = vpop.f32.mrf.mxu0
  %v1023 = vpop.f32.mrf.mxu0
  %v1024 = vadd.f32 0.0, %v1023
  %v1025 = vpop.f32.mrf.mxu0
  %1026 = vdwg.mxu0
  %1027 = vst [vmem:[%s6] sm:$0xff] %v965
  %1028 = vst [vmem:[%s6 + $0x8] sm:$0xff] %v968
  %1029 = vst [vmem:[%s6 + $0x10] sm:$0xff] %v973
  %1030 = vst [vmem:[%s6 + $0x18] sm:$0xff] %v976
  %1031 = vst [vmem:[%s6 + $0x20] sm:$0xff] %v981
  %1032 = vst [vmem:[%s6 + $0x28] sm:$0xff] %v984
  %1033 = vst [vmem:[%s6 + $0x30] sm:$0xff] %v989
  %1034 = vst [vmem:[%s6 + $0x38] sm:$0xff] %v992
  %1035 = vst [vmem:[%s6 + $0x40] sm:$0xff] %v997
  %1036 = vst [vmem:[%s6 + $0x48] sm:$0xff] %v1000
  %1037 = vst [vmem:[%s6 + $0x50] sm:$0xff] %v1005
  %1038 = vst [vmem:[%s6 + $0x58] sm:$0xff] %v1008
  %1039 = vst [vmem:[%s6 + $0x60] sm:$0xff] %v1013
  %1040 = vst [vmem:[%s6 + $0x68] sm:$0xff] %v1016
  %1041 = vst [vmem:[%s6 + $0x70] sm:$0xff] %v1021
  %1042 = vst [vmem:[%s6 + $0x78] sm:$0xff] %v1024
  // Predicated region
  $region26: #{parallel_mlp_forward.1} parent=0 // pred_check
    _
  $region27: #{parallel_mlp_forward.1} parent=0 // pred_check_branch
    %1044 = sbr.rel (0) target = $region29
  $region28: #{parallel_mlp_forward.1} parent=0 // pred_region
    _
  $region29: #{parallel_mlp_forward.1} parent=0 // pred_fallthru
    _
  // Predicated region
  $region30: #{parallel_mlp_forward.1} parent=0 // pred_check
    _
  $region31: #{parallel_mlp_forward.1} parent=0 // pred_check_branch
    %1046 = sbr.rel (0) target = $region33
  $region32: #{parallel_mlp_forward.1} parent=0 // pred_region
    _
  $region33: #{parallel_mlp_forward.1} parent=0 // pred_fallthru
    _

</llo_original>
